<compile_context>
chip_gen: v5e
topology: v5e:2x2
jax: 0.10.0
libtpu: 0.0.40
codegen_flags: <defaults>
</compile_context>

<pallas_src>
import jax
import jax.numpy as jnp
from jax.experimental import pallas as pl
from jax.experimental.pallas import tpu as pltpu

_SUBLANE = 8
_MAX_INPUT_TILE_BYTES = 16 * 1024 * 1024   # cap per streamed input tile
_VMEM_SLACK_BYTES = 2 * 1024 * 1024        # bias, semaphores, Mosaic internals


def _rdown(x, m):
    return (x // m) * m


def _rup(x, m):
    return ((x + m - 1) // m) * m


def _vmem_budget_bytes():
    """Scoped-VMEM budget (requested via vmem_limit_bytes and used for tiling).

    v5e/v6e have 128 MiB physical VMEM (but only 16/32 MiB default scoped
    limit, so we raise it explicitly); v7x has 64 MiB per TensorCore, so we
    never request more than ~48-56 MiB.
    """
    phys = 64 * 1024 * 1024
    try:  # best-effort hardware query; fall back to the smallest (v7x) VMEM
        info = pltpu.get_tpu_info()
        phys = int(getattr(info, "vmem_capacity_bytes", phys)) or phys
    except Exception:
        pass
    return int(min(56 * 1024 * 1024, max(32 * 1024 * 1024, (phys * 3) // 4)))


def _choose_tiles(B, N, E, out_size, in_itemsize, out_itemsize, w_bytes, budget):
    """Pick (tb, n_chunk): batch-tile rows and neighbor-axis chunk size."""
    b_ceil = _rup(max(B, 1), _SUBLANE)

    # Grid-invariant buffers: single-buffered weight + bias, plus slack.
    fixed = w_bytes + 2 * out_size * out_itemsize + _VMEM_SLACK_BYTES
    avail = max(2 * 1024 * 1024, budget - fixed)

    def per_row(n_chunk, with_scratch):
        by = 2 * n_chunk * E * in_itemsize       # double-buffered streamed input
        by += n_chunk * E * 4                    # in-kernel f32 temp of the block
        by += 2 * out_size * out_itemsize        # double-buffered output tile
        if with_scratch:
            by += 4 * E                          # f32 running-max scratch
        return by

    # Preferred: whole neighbor axis in one chunk (no scratch, no masking).
    n_chunk = N
    tb = _rdown(avail // per_row(N, False), _SUBLANE)

    if tb < _SUBLANE:
        # Rows too fat for even an 8-row tile: chunk the neighbor axis (extra
        # "arbitrary" grid axis + running-max scratch).  Chunk stays a multiple
        # of 8 (sublane) for the BlockSpec.  (E-axis chunking not implemented.)
        tb = _SUBLANE
        denom = max(E * (2 * in_itemsize + 8), 1)
        n_fit = (avail // _SUBLANE - 2 * out_size * out_itemsize - 4 * E) // denom
        n_chunk = max(_SUBLANE, _rdown(int(n_fit), _SUBLANE))
        n_chunk = min(n_chunk, _rup(N, _SUBLANE))
        return tb, n_chunk

    # Cap each streamed input tile (~16 MiB): >=2 MiB already reaches ~85% of
    # HBM roofline and the cap keeps v7x's 64 MiB VMEM comfortable.
    row_in = max(N * E * in_itemsize, 1)
    cap_rows = _rdown(_MAX_INPUT_TILE_BYTES // row_in, _SUBLANE)
    if cap_rows >= _SUBLANE:
        tb = min(tb, cap_rows)
    tb = max(_SUBLANE, min(tb, b_ceil))

    # v7x megacore: keep >= 2 steps on the "parallel" batch axis when the batch
    # allows it, so both TensorCores get work.
    if tb >= b_ceil and b_ceil >= 2 * _SUBLANE:
        tb = _rup(pl.cdiv(b_ceil, 2), _SUBLANE)
    return tb, n_chunk


def _make_kernel(n_total, n_chunk, num_n_chunks):
    need_mask = (n_total % n_chunk) != 0
    single = num_n_chunks == 1

    def kernel(x_ref, w_ref, b_ref, o_ref, *scratch):
        j = pl.program_id(1)

        # Neighbor (sublane-axis) max of this chunk.  Upcast inside the kernel
        # so sub-32-bit inputs are streamed from HBM in their native dtype; the
        # kernel is HBM-bound, so this VPU/XLU work hides under the DMA.
        x = x_ref[...].astype(jnp.float32)               # (tb, n_chunk, E)
        if need_mask:
            # Ragged last neighbor chunk: out-of-range rows must not win.
            rows = jax.lax.broadcasted_iota(jnp.int32, (n_chunk, x.shape[-1]), 0)
            valid = (j * n_chunk + rows) < n_total        # (n_chunk, E)
            x = jnp.where(valid[None, :, :], x, -jnp.inf)
        chunk_max = jnp.max(x, axis=1)                    # (tb, E) f32

        def write_output(pooled_f32):
            # Maxima are exact input values, so casting back to the weight
            # dtype (e.g. bf16) is lossless when input/weight dtypes match.
            acc = jnp.dot(pooled_f32.astype(w_ref.dtype), w_ref[...],
                          preferred_element_type=jnp.float32)
            o_ref[...] = (acc + b_ref[...].astype(jnp.float32)).astype(o_ref.dtype)

        if single:
            write_output(chunk_max)
        else:
            pooled_ref = scratch[0]

            @pl.when(j == 0)
            def _():
                pooled_ref[...] = chunk_max

            @pl.when(j > 0)
            def _():
                pooled_ref[...] = jnp.maximum(pooled_ref[...], chunk_max)

            @pl.when(j == num_n_chunks - 1)
            def _():
                write_output(pooled_ref[...])

    return kernel


def maxpool_decoder_forward(inps, weight, bias, *, tb=None, n_chunk=None):
    """Pallas TPU forward of MaxPoolDecoder.

    inps:   (B, N, E)            batch of graph embeddings
    weight: (out_size, in_size)  nn.Linear weight (in_size == E)
    bias:   (out_size,)          nn.Linear bias
    returns (B, out_size) in the promoted input/weight dtype.
    """
    B, N, E = inps.shape
    out_size, in_size = weight.shape
    if in_size != E:
        raise ValueError(f"weight in_size {in_size} != emb_size {E}")
    if bias.shape != (out_size,):
        raise ValueError("bias shape mismatch")

    # No wrapper-side dtype cast / batch padding: both would cost an extra full
    # HBM pass over (B, N, E).
    w = weight.T                                   # (E, out_size)
    b_row = bias.reshape(1, out_size)
    out_dtype = jnp.promote_types(inps.dtype, weight.dtype)

    in_itemsize = jnp.dtype(inps.dtype).itemsize
    out_itemsize = jnp.dtype(out_dtype).itemsize
    w_bytes = E * out_size * jnp.dtype(w.dtype).itemsize

    budget = _vmem_budget_bytes()
    auto_tb, auto_nc = _choose_tiles(B, N, E, out_size, in_itemsize,
                                     out_itemsize, w_bytes, budget)
    tb = auto_tb if tb is None else max(_SUBLANE, _rup(int(tb), _SUBLANE))
    n_chunk = auto_nc if n_chunk is None else int(n_chunk)
    if not (n_chunk == N or n_chunk % _SUBLANE == 0):
        raise ValueError("n_chunk must equal N or be a multiple of 8")

    num_b = pl.cdiv(B, tb)
    num_n = pl.cdiv(N, n_chunk)
    kernel = _make_kernel(N, n_chunk, num_n)
    scratch = [] if num_n == 1 else [pltpu.VMEM((tb, E), jnp.float32)]

    return pl.pallas_call(
        kernel,
        out_shape=jax.ShapeDtypeStruct((B, out_size), out_dtype),
        grid_spec=pltpu.PrefetchScalarGridSpec(
            num_scalar_prefetch=0,
            grid=(num_b, num_n),
            in_specs=[
                # streamed (batch, neighbor-chunk) tile, double-buffered
                pl.BlockSpec((tb, n_chunk, E), lambda i, j: (i, j, 0)),
                # grid-invariant weight / bias: resident and single-buffered
                pl.BlockSpec((E, out_size), lambda i, j: (0, 0),
                             pipeline_mode=pl.Buffered(1)),
                pl.BlockSpec((1, out_size), lambda i, j: (0, 0),
                             pipeline_mode=pl.Buffered(1)),
            ],
            out_specs=pl.BlockSpec((tb, out_size), lambda i, j: (i, 0)),
            scratch_shapes=scratch,
        ),
        compiler_params=pltpu.CompilerParams(
            # Batch tiles are independent -> shard over v7x's 2 TensorCores;
            # the neighbor-chunk axis carries the running max -> "arbitrary".
            dimension_semantics=("parallel", "arbitrary"),
            vmem_limit_bytes=budget,
        ),
    )(inps, w, b_row)


def _reference(inps, weight, bias):
    pooled = jnp.max(inps.astype(jnp.float32), axis=1)
    return jnp.dot(pooled, weight.astype(jnp.float32).T,
                   precision=jax.lax.Precision.HIGHEST) + bias.astype(jnp.float32)


def _linear_params(key, out_size, in_size, dtype):
    # torch.nn.Linear default init: U(-1/sqrt(in), 1/sqrt(in))
    bound = 1.0 / (in_size ** 0.5)
    kw, kb = jax.random.split(key)
    w = jax.random.uniform(kw, (out_size, in_size), jnp.float32, -bound, bound)
    b = jax.random.uniform(kb, (out_size,), jnp.float32, -bound, bound)
    return w.astype(dtype), b.astype(dtype)


if __name__ == "__main__":
    key = jax.random.PRNGKey(0)
    k1, k2, k3, k4, k5, k6 = jax.random.split(key, 6)

    # Case 1: module-sized example (batch=4 graphs, 8 neighbors, emb 32 -> 16).
    x1 = jax.random.normal(k1, (4, 8, 32), jnp.float32)
    w1, b1 = _linear_params(k2, 16, 32, jnp.float32)
    out1 = jax.block_until_ready(maxpool_decoder_forward(x1, w1, b1))
    ref1 = _reference(x1, w1, b1)
    assert out1.shape == (4, 16)
    assert jnp.allclose(out1, ref1.astype(out1.dtype), atol=1e-4, rtol=1e-4)

    # Case 2: bf16 streamed in its native dtype + ragged batch tiles (B=10).
    x2 = jax.random.normal(k3, (10, 24, 128), jnp.float32).astype(jnp.bfloat16)
    w2, b2 = _linear_params(k4, 64, 128, jnp.bfloat16)
    out2 = jax.block_until_ready(maxpool_decoder_forward(x2, w2, b2))
    ref2 = _reference(x2, w2, b2)
    assert out2.shape == (10, 64) and out2.dtype == jnp.bfloat16
    assert jnp.allclose(out2.astype(jnp.float32), ref2, atol=2e-2, rtol=2e-2)

    # Case 3: forced neighbor-axis chunking (N=20 in chunks of 8, masked tail)
    # to exercise the fat-row fallback path (running-max scratch + pl.when).
    x3 = jax.random.normal(k5, (9, 20, 64), jnp.float32)
    w3, b3 = _linear_params(k6, 32, 64, jnp.float32)
    out3 = jax.block_until_ready(maxpool_decoder_forward(x3, w3, b3, n_chunk=8))
    ref3 = _reference(x3, w3, b3)
    assert out3.shape == (9, 32)
    assert jnp.allclose(out3, ref3, atol=1e-4, rtol=1e-4)

    print("KERNEL_OK")
</pallas_src>

<mosaic_0001>
module attributes {stable_mosaic.version = 11 : i64} {
  func.func @kernel(%arg0: i32, %arg1: i32, %arg2: memref<8x8x32xf32, #tpu.memory_space<vmem>>, %arg3: memref<32x16xf32, #tpu.memory_space<vmem>>, %arg4: memref<1x16xf32, #tpu.memory_space<vmem>>, %arg5: memref<8x16xf32, #tpu.memory_space<vmem>>) attributes {dimension_semantics = [#tpu.dimension_semantics<parallel>, #tpu.dimension_semantics<arbitrary>], iteration_bounds = array<i64: 1, 1>, scalar_prefetch = 0 : i64, scratch_operands = 0 : i64, tpu.core_type = #tpu.core_type<tc>, window_params = [{transform_indices = @transform_0, window_bounds = array<i64: 8, 8, 32>}, {pipeline_mode = #tpu.pipeline_mode<synchronous>, transform_indices = @transform_1, window_bounds = array<i64: 32, 16>}, {pipeline_mode = #tpu.pipeline_mode<synchronous>, transform_indices = @transform_2, window_bounds = array<i64: 1, 16>}, {transform_indices = @transform_3, window_bounds = array<i64: 8, 16>}]} {
    %c0 = arith.constant 0 : index
    %c0_0 = arith.constant 0 : index
    %c0_1 = arith.constant 0 : index
    %0 = vector.load %arg2[%c0, %c0_0, %c0_1] : memref<8x8x32xf32, #tpu.memory_space<vmem>>, vector<8x8x32xf32>
    %cst = arith.constant dense<0xFF800000> : vector<8x32xf32>
    %1 = vector.multi_reduction <maximumf>, %0, %cst [1] : vector<8x8x32xf32> to vector<8x32xf32>
    %c0_2 = arith.constant 0 : index
    %c0_3 = arith.constant 0 : index
    %2 = vector.load %arg3[%c0_2, %c0_3] : memref<32x16xf32, #tpu.memory_space<vmem>>, vector<32x16xf32>
    %cst_4 = arith.constant dense<0.000000e+00> : vector<8x16xf32>
    %3 = tpu.matmul %1, %2, %cst_4 {dimension_numbers = #tpu.dot_dimension_numbers<[1], [0], [0], [1], [0, 0, 1, 1], [], []>} : vector<8x32xf32>, vector<32x16xf32>, vector<8x16xf32> -> vector<8x16xf32>
    %c0_5 = arith.constant 0 : index
    %c0_6 = arith.constant 0 : index
    %4 = vector.load %arg4[%c0_5, %c0_6] : memref<1x16xf32, #tpu.memory_space<vmem>>, vector<1x16xf32>
    %5 = vector.broadcast %4 : vector<1x16xf32> to vector<8x16xf32>
    %6 = arith.addf %3, %5 : vector<8x16xf32>
    %c0_7 = arith.constant 0 : index
    %c0_8 = arith.constant 0 : index
    %7 = vector.load %arg5[%c0_7, %c0_8] : memref<8x16xf32, #tpu.memory_space<vmem>>, vector<8x16xf32>
    tpu.vector_store %arg5[%c0_7, %c0_8], %6 {strides = array<i32>} : memref<8x16xf32, #tpu.memory_space<vmem>>, vector<8x16xf32>,
    return
  }
  func.func @transform_0(%arg0: i32, %arg1: i32) -> (i32, i32, i32) {
    %c0_i32 = arith.constant 0 : i32
    %c0_i32_0 = arith.constant 0 : i32
    return %arg0, %arg1, %c0_i32 : i32, i32, i32
  }
  func.func @transform_1(%arg0: i32, %arg1: i32) -> (i32, i32) {
    %c0_i32 = arith.constant 0 : i32
    %c0_i32_0 = arith.constant 0 : i32
    %c0_i32_1 = arith.constant 0 : i32
    return %c0_i32, %c0_i32_0 : i32, i32
  }
  func.func @transform_2(%arg0: i32, %arg1: i32) -> (i32, i32) {
    %c0_i32 = arith.constant 0 : i32
    %c0_i32_0 = arith.constant 0 : i32
    %c0_i32_1 = arith.constant 0 : i32
    return %c0_i32, %c0_i32_0 : i32, i32
  }
  func.func @transform_3(%arg0: i32, %arg1: i32) -> (i32, i32) {
    %c0_i32 = arith.constant 0 : i32
    %c0_i32_0 = arith.constant 0 : i32
    return %arg0, %c0_i32 : i32, i32
  }
}

</mosaic_0001>

<llo_original>
// kernel: tpu_custom_call.1
$region0: #{tpu_custom_call.1}
  #allocation0 [shape = 'u32[]', space=smem, size = 0x4, offset = 0x4, fixed_abs, tag = 'smem constant byte address 0x4 - core index']
  #allocation1 [shape = 'u32[72,128]{1,0:T(1,128)}', space=vmem, size = 0x9000, scoped, tag = 'internal scratch']
  %s0 = inlined_call_operand.vmem [shape: f32[4,8,32], index: 0, kind: input, shape index: {}]
  %s1 = inlined_call_operand.vmem [shape: f32[32,16], index: 1, kind: input, shape index: {}]
  %s2 = inlined_call_operand.vmem [shape: f32[1,16], index: 2, kind: input, shape index: {}]
  %s3 = inlined_call_operand.hbm [shape: f32[4,16], index: 3, kind: output, shape index: {}]
  %s4 = sld [smem:[#allocation0]]
  $region22: #{tpu_custom_call.1} parent=0
    _
  %s6 = ssub.s32 1, %s4
  %s7 = scalar_select 0, %s6, %s4
  $region1: #{tpu_custom_call.1} parent=0
    #allocation2 [shape = 'u8[4096]{0}', space=vmem, size = 0x1000, scoped, tag = 'output window, operand 0, single buffered']
    #allocation3 [shape = 's32[1]{0}', space=sflag, size = 0x4, scoped, tag = 'scoped memory for tpu_custom_call.1']
    %8 = vsyncpa [#allocation3], 0
    // Predicated region
    $region2: #{tpu_custom_call.1} parent=1 // pred_check
      _
    $region3: #{tpu_custom_call.1} parent=1 // pred_check_branch
      %10 = sbr.rel (0) target = $region5
    $region4: #{tpu_custom_call.1} parent=1 // pred_region
      _
    $region5: #{tpu_custom_call.1} parent=1 // pred_fallthru
      _
    // Predicated region
    $region6: #{tpu_custom_call.1} parent=1 // pred_check
      _
    $region7: #{tpu_custom_call.1} parent=1 // pred_check_branch
      %12 = sbr.rel (0) target = $region9
    $region8: #{tpu_custom_call.1} parent=1 // pred_region
      _
    $region9: #{tpu_custom_call.1} parent=1 // pred_fallthru
      _
    // Predicated region
    $region10: #{tpu_custom_call.1} parent=1 // pred_check
      _
    $region11: #{tpu_custom_call.1} parent=1 // pred_check_branch
      %14 = sbr.rel (0) target = $region13
    $region12: #{tpu_custom_call.1} parent=1 // pred_region
      _
    $region13: #{tpu_custom_call.1} parent=1 // pred_fallthru
      _
    %v15 = vld [vmem:[%s0] sm:$0xff]
    %v16 = vld [vmem:[%s0 + $0x8] sm:$0xff]
    %v17 = vld [vmem:[%s0 + $0x10] sm:$0xff]
    %v18 = vld [vmem:[%s0 + $0x18] sm:$0xff]
    %v19 = vld [vmem:[%s0 + $0x20] sm:$0xff]
    %v20 = vld [vmem:[%s0 + $0x28] sm:$0xff]
    %v21 = vld [vmem:[%s0 + $0x30] sm:$0xff]
    %v22 = vld [vmem:[%s0 + $0x38] sm:$0xff]
    %vm23 = vcmask 261120
    %v24 = vsel %vm23, %v15, -inf
    %v25 = vrot.slane %v24, 4
    %v26 = vmax.f32 %v24, %v25
    %v27 = vrot.slane %v26, 2
    %v28 = vmax.f32 %v26, %v27
    %v29 = vrot.slane %v28, 1
    %v30 = vmax.f32 %v28, %v29
    %v31 = vsel %vm23, %v16, -inf
    %v32 = vrot.slane %v31, 4
    %v33 = vmax.f32 %v31, %v32
    %v34 = vrot.slane %v33, 2
    %v35 = vmax.f32 %v33, %v34
    %v36 = vrot.slane %v35, 1
    %v37 = vmax.f32 %v35, %v36
    %v38 = vsel %vm23, %v17, -inf
    %v39 = vrot.slane %v38, 4
    %v40 = vmax.f32 %v38, %v39
    %v41 = vrot.slane %v40, 2
    %v42 = vmax.f32 %v40, %v41
    %v43 = vrot.slane %v42, 1
    %v44 = vmax.f32 %v42, %v43
    %v45 = vsel %vm23, %v18, -inf
    %v46 = vrot.slane %v45, 4
    %v47 = vmax.f32 %v45, %v46
    %v48 = vrot.slane %v47, 2
    %v49 = vmax.f32 %v47, %v48
    %v50 = vrot.slane %v49, 1
    %v51 = vmax.f32 %v49, %v50
    %v52 = vsel %vm23, %v19, -inf
    %v53 = vrot.slane %v52, 4
    %v54 = vmax.f32 %v52, %v53
    %v55 = vrot.slane %v54, 2
    %v56 = vmax.f32 %v54, %v55
    %v57 = vrot.slane %v56, 1
    %v58 = vmax.f32 %v56, %v57
    %v59 = vsel %vm23, %v20, -inf
    %v60 = vrot.slane %v59, 4
    %v61 = vmax.f32 %v59, %v60
    %v62 = vrot.slane %v61, 2
    %v63 = vmax.f32 %v61, %v62
    %v64 = vrot.slane %v63, 1
    %v65 = vmax.f32 %v63, %v64
    %v66 = vsel %vm23, %v21, -inf
    %v67 = vrot.slane %v66, 4
    %v68 = vmax.f32 %v66, %v67
    %v69 = vrot.slane %v68, 2
    %v70 = vmax.f32 %v68, %v69
    %v71 = vrot.slane %v70, 1
    %v72 = vmax.f32 %v70, %v71
    %v73 = vsel %vm23, %v22, -inf
    %v74 = vrot.slane %v73, 4
    %v75 = vmax.f32 %v73, %v74
    %v76 = vrot.slane %v75, 2
    %v77 = vmax.f32 %v75, %v76
    %v78 = vrot.slane %v77, 1
    %v79 = vmax.f32 %v77, %v78
    %v80 = vld [vmem:[%s1] sm:$0xff]
    %v81 = vld [vmem:[%s1 + $0x8] sm:$0xff]
    %v82 = vld [vmem:[%s1 + $0x10] sm:$0xff]
    %v83 = vld [vmem:[%s1 + $0x18] sm:$0xff]
    %v84 = vld [vmem:[%s2] sm:$0x1]
    %v86 = vperm.slane %v84, 0
    %vm96 = vcmask 1041409
    %v97 = vsel %vm96, %v37, %v30
    %vm98 = vcmask 1042434
    %v99 = vsel %vm98, %v44, %v97
    %vm100 = vcmask 1043459
    %v101 = vsel %vm100, %v51, %v99
    %vm102 = vcmask 1044484
    %v103 = vsel %vm102, %v58, %v101
    %vm104 = vcmask 1045509
    %v105 = vsel %vm104, %v65, %v103
    %vm106 = vcmask 1046534
    %v107 = vsel %vm106, %v72, %v105
    %vm108 = vcmask 1047559
    %v109 = vsel %vm108, %v79, %v107
    %v110 = vsel %vm23, %v109, 0
    %112 = vmatpush.msra.mxu0 0.0
    %113 = vmatpush.msra.mxu0 0.0
    %114 = vmatpush.msra.mxu0 0.0
    %115 = vmatpush.msra.mxu0 0.0
    %116 = vmatpush.msra.mxu0 0.0
    %117 = vmatpush.msra.mxu0 0.0
    %118 = vmatpush.msra.mxu0 0.0
    %119 = vmatpush.msra.mxu0 0.0
    %120 = vmatpush.msra.mxu0 0.0
    %121 = vmatpush.msra.mxu0 0.0
    %122 = vmatpush.msra.mxu0 0.0
    %123 = vmatpush.msra.mxu0 0.0
    %124 = vmatpush.msra.mxu0 %v83
    %125 = vmatpush.msra.mxu0 %v82
    %126 = vmatpush.msra.mxu0 %v81
    %127 = vmatpush.msra.mxu0 %v80
    %128 = vmatmul.f32.gmra.mxu0 %v110
    %v129 = vpop.f32.mrf.mxu0
    %v130 = vadd.f32 %v86, %v129
    %131 = vdwg.mxu0
    %vm132 = vcmask 130048
    %133 = vst.msk [vmem:[#allocation2] sm:$0xff] %vm132, %v130
    // Predicated region
    $region14: #{tpu_custom_call.1} parent=1 // pred_check
      _
    $region15: #{tpu_custom_call.1} parent=1 // pred_check_branch
      %135 = sbr.rel (0) target = $region17
    $region16: #{tpu_custom_call.1} parent=1 // pred_region
      %137 = vsyncadd [#allocation3], 64
      %s138 = sshll.u32 [#allocation2], 4
      %s139 = int_to_ptr.vmem [resolvable:$true] %s138
      %s140 = sshll.u32 %s3, 4
      %s141 = int_to_ptr.hbm [resolvable:$true] %s140
      %146 = dma.vmem_to_hbm [thread:$0]  %s139, 64, %s141, [#allocation3], 64, 64, 4
    $region17: #{tpu_custom_call.1} parent=1 // pred_fallthru
      _
    // Predicated region
    $region18: #{tpu_custom_call.1} parent=1 // pred_check
      _
    $region19: #{tpu_custom_call.1} parent=1 // pred_check_branch
      %148 = sbr.rel (0) target = $region21
    $region20: #{tpu_custom_call.1} parent=1 // pred_region
      %150 = dma.done [#allocation3], 128
    $region21: #{tpu_custom_call.1} parent=1 // pred_fallthru
      _
    %151 = vsyncpa [#allocation3], 1

</llo_original>
